<compile_context>
chip_gen: v7x
topology: tpu7x:2x2x1
jax: 0.10.0
libtpu: 0.0.40
codegen_flags: <defaults>
</compile_context>

<pallas_src>
import functools

import jax
import jax.numpy as jnp
from jax.experimental import pallas as pl
from jax.experimental.pallas import tpu as pltpu

_NEG_INF = -1e30          # large finite f32 mask value (safe with self-loops)
_LEAKY_SLOPE = 0.2        # GATConv default negative_slope


# ----------------------------- kernel helpers ------------------------------

def _leaky_relu(x):
    return jnp.where(x > 0, x, _LEAKY_SLOPE * x)


def _elu(x):
    # clamp the exp argument so the unselected branch never produces inf
    return jnp.where(x > 0, x, jnp.exp(jnp.minimum(x, 0.0)) - 1.0)


# ------------------------------ Pallas kernels ------------------------------

def _gat_project_kernel(x_ref, w_ref, a_ref, feat_ref, scores_ref):
    """feat = x @ W (all heads fused); scores = feat @ A_packed.

    x_ref:      (TILE_N, F_in)
    w_ref:      (F_in, heads*D)
    a_ref:      (heads*D, 2*heads)   block-structured [a_src | a_dst]
    feat_ref:   (TILE_N, heads*D)    out
    scores_ref: (TILE_N, 2*heads)    out (cols [0:heads]=alpha_src, [heads:]=alpha_dst)
    """
    feat = jnp.dot(x_ref[...], w_ref[...], preferred_element_type=jnp.float32)
    feat_ref[...] = feat
    scores_ref[...] = jnp.dot(feat, a_ref[...],
                              preferred_element_type=jnp.float32)


def _gat_attend_kernel(adj_ref, s_full_ref, s_blk_ref, feat_ref, bias_ref,
                       out_ref, *, heads, out_dim, activation):
    """Masked attention + weighted aggregation for one target row block.

    adj_ref:    (TILE_N, N)        int8 adjacency (target i, source j), with self loops
    s_full_ref: (N, 2*heads)       scores for ALL source nodes
    s_blk_ref:  (TILE_N, 2*heads)  scores for this target block
    feat_ref:   (N, heads*D)       projected features of ALL source nodes
    bias_ref:   (1, heads*D)
    out_ref:    (TILE_N, heads*D)
    """
    adjf = adj_ref[...].astype(jnp.float32)
    mask_bias = jnp.where(adjf > 0.0, 0.0, _NEG_INF)        # (TILE_N, N), f32

    s_src_t = s_full_ref[...].T                              # (2*heads, N): ONE transpose
    s_dst = s_blk_ref[...]                                   # (TILE_N, 2*heads)
    feat = feat_ref[...]                                     # (N, heads*D)
    bias = bias_ref[...]                                     # (1, heads*D)

    for h in range(heads):                                   # static unroll over heads
        # e[i, j] = LeakyReLU(alpha_dst[i] + alpha_src[j]) + mask
        e = _leaky_relu(s_dst[:, heads + h:heads + h + 1]
                        + s_src_t[h:h + 1, :]) + mask_bias   # (TILE_N, N)
        m = jnp.max(e, axis=1, keepdims=True)
        p = jnp.exp(e - m)                                   # unnormalized softmax
        denom = jnp.sum(p, axis=1, keepdims=True)
        o = jnp.dot(p, feat[:, h * out_dim:(h + 1) * out_dim],
                    preferred_element_type=jnp.float32)      # (TILE_N, D)
        # deferred normalization: scale N*D elements instead of dividing N*N
        o = o * pl.reciprocal(denom, approx=True)
        o = o + bias[:, h * out_dim:(h + 1) * out_dim]

        if activation == "elu":
            o = _elu(o)
        elif activation == "log_softmax":
            # only used when heads == 1, so `o` is the full layer output
            mm = jnp.max(o, axis=1, keepdims=True)
            z = o - mm
            o = z - jnp.log(jnp.sum(jnp.exp(z), axis=1, keepdims=True))

        out_ref[:, h * out_dim:(h + 1) * out_dim] = o        # static lane offset write


# ------------------------------ host wrappers -------------------------------

def _pick_tile(n):
    for t in (128, 64, 32, 16, 8):
        if n % t == 0:
            return t
    return n


def _pack_attention(a_src, a_dst):
    """Pack per-head attention vectors into one block-structured matrix.

    a_src, a_dst: (heads, D) -> A: (heads*D, 2*heads) with
      A[h*D:(h+1)*D, h]         = a_src[h]
      A[h*D:(h+1)*D, heads + h] = a_dst[h]
    so that (feat @ A)[:, h] = sum_d feat_h[:, d] * a_src[h, d], etc.
    """
    heads, d = a_src.shape
    A = jnp.zeros((heads * d, 2 * heads), jnp.float32)
    for h in range(heads):
        A = A.at[h * d:(h + 1) * d, h].set(a_src[h])
        A = A.at[h * d:(h + 1) * d, heads + h].set(a_dst[h])
    return A


def _gat_layer(x, adj_i8, w, a_packed, bias, *, heads, out_dim, activation,
               tile_n):
    """One GATConv layer (concat=True) as two gridded pallas_calls."""
    N, f_in = x.shape
    hd = heads * out_dim
    grid = (N // tile_n,)
    cparams = pltpu.CompilerParams(
        dimension_semantics=("parallel",),
        vmem_limit_bytes=64 * 1024 * 1024,
    )

    # --- 1) projection: feat = x @ W, scores = feat @ A_packed (row-parallel)
    feat, scores = pl.pallas_call(
        _gat_project_kernel,
        out_shape=(jax.ShapeDtypeStruct((N, hd), jnp.float32),
                   jax.ShapeDtypeStruct((N, 2 * heads), jnp.float32)),
        grid=grid,
        in_specs=[
            pl.BlockSpec((tile_n, f_in), lambda i: (i, 0)),
            pl.BlockSpec((f_in, hd), lambda i: (0, 0)),
            pl.BlockSpec((hd, 2 * heads), lambda i: (0, 0)),
        ],
        out_specs=(
            pl.BlockSpec((tile_n, hd), lambda i: (i, 0)),
            pl.BlockSpec((tile_n, 2 * heads), lambda i: (i, 0)),
        ),
        compiler_params=cparams,
    )(x, w, a_packed)

    # --- 2) masked attention + aggregation over target row blocks
    kernel = functools.partial(_gat_attend_kernel, heads=heads,
                               out_dim=out_dim, activation=activation)
    out = pl.pallas_call(
        kernel,
        out_shape=jax.ShapeDtypeStruct((N, hd), jnp.float32),
        grid=grid,
        in_specs=[
            pl.BlockSpec((tile_n, N), lambda i: (i, 0)),        # adj block (int8)
            pl.BlockSpec((N, 2 * heads), lambda i: (0, 0)),     # scores (all sources)
            pl.BlockSpec((tile_n, 2 * heads), lambda i: (i, 0)),  # scores (this block)
            pl.BlockSpec((N, hd), lambda i: (0, 0)),            # feat (all sources)
            pl.BlockSpec((1, hd), lambda i: (0, 0)),            # bias
        ],
        out_specs=pl.BlockSpec((tile_n, hd), lambda i: (i, 0)),
        compiler_params=cparams,
    )(adj_i8, scores, scores, feat, bias)
    return out


def gat_forward(x, adj_i8, params, *, heads, hidden, num_classes):
    """Eval-mode GAT forward: dropout -> conv1 -> elu -> dropout -> conv2 -> log_softmax.

    Dropout(p=0.6, training=False) is identity, so it is omitted.
    """
    tile_n = _pick_tile(x.shape[0])
    a1 = _pack_attention(params["a1_src"], params["a1_dst"])
    a2 = _pack_attention(params["a2_src"], params["a2_dst"])

    h1 = _gat_layer(x, adj_i8, params["w1"], a1, params["b1"],
                    heads=heads, out_dim=hidden, activation="elu",
                    tile_n=tile_n)
    out = _gat_layer(h1, adj_i8, params["w2"], a2, params["b2"],
                     heads=1, out_dim=num_classes, activation="log_softmax",
                     tile_n=tile_n)
    return out


# --------------------------- params / reference -----------------------------

def _glorot(key, shape):
    fan_in, fan_out = shape[-2], shape[-1]
    limit = jnp.sqrt(6.0 / (fan_in + fan_out))
    return jax.random.uniform(key, shape, jnp.float32, -limit, limit)


def init_params(key, num_features, hidden, heads, num_classes):
    ks = jax.random.split(key, 6)
    return {
        # conv1: GATConv(num_features, hidden, heads)
        "w1": _glorot(ks[0], (num_features, heads * hidden)),
        "a1_src": _glorot(ks[1], (heads, hidden)),
        "a1_dst": _glorot(ks[2], (heads, hidden)),
        "b1": jnp.zeros((1, heads * hidden), jnp.float32),
        # conv2: GATConv(hidden * heads, num_classes, heads=1)
        "w2": _glorot(ks[3], (heads * hidden, num_classes)),
        "a2_src": _glorot(ks[4], (1, num_classes)),
        "a2_dst": _glorot(ks[5], (1, num_classes)),
        "b2": jnp.zeros((1, num_classes), jnp.float32),
    }


def _reference_forward(x, adj_i8, params, *, heads, hidden, num_classes):
    """Pure-JAX reference (same math, exact softmax normalization)."""
    hi = jax.lax.Precision.HIGHEST
    bias_mat = jnp.where(adj_i8.astype(jnp.float32) > 0, 0.0, _NEG_INF)

    def layer(h_in, w, a_src, a_dst, b, nh, d):
        feat = jnp.dot(h_in, w, precision=hi)
        outs = []
        for hh in range(nh):
            f = feat[:, hh * d:(hh + 1) * d]
            asrc = jnp.dot(f, a_src[hh], precision=hi)
            adst = jnp.dot(f, a_dst[hh], precision=hi)
            e = adst[:, None] + asrc[None, :]
            e = jnp.where(e > 0, e, _LEAKY_SLOPE * e) + bias_mat
            attn = jax.nn.softmax(e, axis=1)
            outs.append(jnp.dot(attn, f, precision=hi))
        return jnp.concatenate(outs, axis=1) + b

    h1 = layer(x, params["w1"], params["a1_src"], params["a1_dst"],
               params["b1"], heads, hidden)
    h1 = jax.nn.elu(h1)
    h2 = layer(h1, params["w2"], params["a2_src"], params["a2_dst"],
               params["b2"], 1, num_classes)
    return jax.nn.log_softmax(h2, axis=1)


# ---------------------------------- main ------------------------------------

if __name__ == "__main__":
    # Small synthetic graph (stand-in for Planetoid/Cora which needs file I/O).
    N = 256           # number of nodes -> grid of 2 row blocks (TILE_N = 128)
    F_IN = 64         # dataset.num_features (synthetic)
    HIDDEN = 8        # hidden_channels
    HEADS = 4         # heads
    NUM_CLASSES = 8   # dataset.num_classes (synthetic)
    NUM_EDGES = 1024

    key = jax.random.PRNGKey(0)
    kx, ks, kd, kp = jax.random.split(key, 4)

    # Node features (row-normalized, mimicking NormalizeFeatures()).
    x = jax.random.uniform(kx, (N, F_IN), jnp.float32)
    x = x / jnp.maximum(jnp.sum(x, axis=1, keepdims=True), 1e-12)

    # Random edge_index -> dense int8 adjacency adj[target, source] + self loops.
    src = jax.random.randint(ks, (NUM_EDGES,), 0, N)
    dst = jax.random.randint(kd, (NUM_EDGES,), 0, N)
    adj = jnp.zeros((N, N), jnp.int8).at[dst, src].set(1)
    adj = adj.at[jnp.arange(N), jnp.arange(N)].set(1)  # add_self_loops=True

    params = init_params(kp, F_IN, HIDDEN, HEADS, NUM_CLASSES)

    out = gat_forward(x, adj, params, heads=HEADS, hidden=HIDDEN,
                      num_classes=NUM_CLASSES)
    out = jax.block_until_ready(out)

    assert out.shape == (N, NUM_CLASSES)
    # log_softmax rows must sum (in prob space) to ~1
    assert bool(jnp.all(jnp.abs(jnp.sum(jnp.exp(out), axis=1) - 1.0) < 1e-4))

    # Compare against a pure-JAX reference (approx reciprocal + MXU rounding
    # allow small differences).
    ref = _reference_forward(x, adj, params, heads=HEADS, hidden=HIDDEN,
                             num_classes=NUM_CLASSES)
    max_err = float(jnp.max(jnp.abs(out - ref)))
    assert max_err < 5e-2, f"max abs error vs reference: {max_err}"

    print("KERNEL_OK")
</pallas_src>

<mosaic_0001>
module attributes {stable_mosaic.version = 11 : i64} {
  func.func @_gat_project_kernel(%arg0: i32, %arg1: memref<128x64xf32, #tpu.memory_space<vmem>>, %arg2: memref<64x32xf32, #tpu.memory_space<vmem>>, %arg3: memref<32x8xf32, #tpu.memory_space<vmem>>, %arg4: memref<128x32xf32, #tpu.memory_space<vmem>>, %arg5: memref<128x8xf32, #tpu.memory_space<vmem>>) attributes {dimension_semantics = [#tpu.dimension_semantics<parallel>], iteration_bounds = array<i64: 2>, scalar_prefetch = 0 : i64, scratch_operands = 0 : i64, tpu.core_type = #tpu.core_type<tc>, window_params = [{transform_indices = @transform_0, window_bounds = array<i64: 128, 64>}, {pipeline_mode = #tpu.pipeline_mode<synchronous>, transform_indices = @transform_1, window_bounds = array<i64: 64, 32>}, {pipeline_mode = #tpu.pipeline_mode<synchronous>, transform_indices = @transform_2, window_bounds = array<i64: 32, 8>}, {transform_indices = @transform_3, window_bounds = array<i64: 128, 32>}, {transform_indices = @transform_4, window_bounds = array<i64: 128, 8>}]} {
    %c0 = arith.constant 0 : index
    %c0_0 = arith.constant 0 : index
    %0 = vector.load %arg1[%c0, %c0_0] : memref<128x64xf32, #tpu.memory_space<vmem>>, vector<128x64xf32>
    %c0_1 = arith.constant 0 : index
    %c0_2 = arith.constant 0 : index
    %1 = vector.load %arg2[%c0_1, %c0_2] : memref<64x32xf32, #tpu.memory_space<vmem>>, vector<64x32xf32>
    %cst = arith.constant dense<0.000000e+00> : vector<128x32xf32>
    %2 = tpu.matmul %0, %1, %cst {dimension_numbers = #tpu.dot_dimension_numbers<[1], [0], [0], [1], [0, 0, 1, 1], [], []>} : vector<128x64xf32>, vector<64x32xf32>, vector<128x32xf32> -> vector<128x32xf32>
    %c0_3 = arith.constant 0 : index
    %c0_4 = arith.constant 0 : index
    %3 = vector.load %arg4[%c0_3, %c0_4] : memref<128x32xf32, #tpu.memory_space<vmem>>, vector<128x32xf32>
    tpu.vector_store %arg4[%c0_3, %c0_4], %2 {strides = array<i32>} : memref<128x32xf32, #tpu.memory_space<vmem>>, vector<128x32xf32>,
    %c0_5 = arith.constant 0 : index
    %c0_6 = arith.constant 0 : index
    %4 = vector.load %arg3[%c0_5, %c0_6] : memref<32x8xf32, #tpu.memory_space<vmem>>, vector<32x8xf32>
    %cst_7 = arith.constant dense<0.000000e+00> : vector<128x8xf32>
    %5 = tpu.matmul %2, %4, %cst_7 {dimension_numbers = #tpu.dot_dimension_numbers<[1], [0], [0], [1], [0, 0, 1, 1], [], []>} : vector<128x32xf32>, vector<32x8xf32>, vector<128x8xf32> -> vector<128x8xf32>
    %c0_8 = arith.constant 0 : index
    %c0_9 = arith.constant 0 : index
    %6 = vector.load %arg5[%c0_8, %c0_9] : memref<128x8xf32, #tpu.memory_space<vmem>>, vector<128x8xf32>
    tpu.vector_store %arg5[%c0_8, %c0_9], %5 {strides = array<i32>} : memref<128x8xf32, #tpu.memory_space<vmem>>, vector<128x8xf32>,
    return
  }
  func.func @transform_0(%arg0: i32) -> (i32, i32) {
    %c0_i32 = arith.constant 0 : i32
    %c0_i32_0 = arith.constant 0 : i32
    return %arg0, %c0_i32 : i32, i32
  }
  func.func @transform_1(%arg0: i32) -> (i32, i32) {
    %c0_i32 = arith.constant 0 : i32
    %c0_i32_0 = arith.constant 0 : i32
    %c0_i32_1 = arith.constant 0 : i32
    return %c0_i32, %c0_i32_0 : i32, i32
  }
  func.func @transform_2(%arg0: i32) -> (i32, i32) {
    %c0_i32 = arith.constant 0 : i32
    %c0_i32_0 = arith.constant 0 : i32
    %c0_i32_1 = arith.constant 0 : i32
    return %c0_i32, %c0_i32_0 : i32, i32
  }
  func.func @transform_3(%arg0: i32) -> (i32, i32) {
    %c0_i32 = arith.constant 0 : i32
    %c0_i32_0 = arith.constant 0 : i32
    return %arg0, %c0_i32 : i32, i32
  }
  func.func @transform_4(%arg0: i32) -> (i32, i32) {
    %c0_i32 = arith.constant 0 : i32
    %c0_i32_0 = arith.constant 0 : i32
    return %arg0, %c0_i32 : i32, i32
  }
}

</mosaic_0001>

<llo_original>
// kernel: tpu_custom_call.1
$region0: #{tpu_custom_call.1}
  #allocation0 [shape = 'u32[]', space=smem, size = 0x4, offset = 0x4, fixed_abs, tag = 'smem constant byte address 0x4 - core index']
  #allocation1 [shape = 'u32[144,128]{1,0:T(1,128)}', space=vmem, size = 0x12000, scoped, tag = 'internal scratch']
  %s0 = inlined_call_operand.hbm [shape: f32[256,64], index: 0, kind: input, shape index: {}]
  %s1 = inlined_call_operand.hbm [shape: f32[64,32], index: 1, kind: input, shape index: {}]
  %s2 = inlined_call_operand.hbm [shape: f32[32,8], index: 2, kind: input, shape index: {}]
  %s3 = inlined_call_operand.hbm [shape: f32[256,32], index: 3, kind: output, shape index: {0}]
  %s4 = inlined_call_operand.hbm [shape: f32[256,8], index: 4, kind: output, shape index: {1}]
  %5 = xla_tuple %s3, %s4
  %s6 = sld [smem:[#allocation0]]
  $region65: #{tpu_custom_call.1} parent=0
    _
  %s8 = ssub.s32 1, %s6
  %s9 = scalar_select 0, %s8, %s6
  $region1: #{tpu_custom_call.1} parent=0
    #allocation2 [shape = 'u8[131072]{0}', space=vmem, size = 0x20000, scoped, tag = 'input window, operand 0']
    #allocation3 [shape = 's32[2]{0}', space=sflag, size = 0x8, scoped, tag = 'scoped memory for tpu_custom_call.1']
    #allocation4 [shape = 's32[2]{0}', space=sflag, size = 0x8, scoped, tag = 'scoped memory for tpu_custom_call.1']
    #allocation5 [shape = 'u8[32768]{0}', space=vmem, size = 0x8000, scoped, tag = 'input window, operand 1, single buffered']
    #allocation6 [shape = 's32[1]{0}', space=sflag, size = 0x4, scoped, tag = 'scoped memory for tpu_custom_call.1']
    #allocation7 [shape = 'u8[16384]{0}', space=vmem, size = 0x4000, scoped, tag = 'input window, operand 2, single buffered']
    #allocation8 [shape = 'u8[131072]{0}', space=vmem, size = 0x20000, scoped, tag = 'output window, operand 0']
    #allocation9 [shape = 'u8[131072]{0}', space=vmem, size = 0x20000, scoped, tag = 'output window, operand 1']
    #allocation10 [shape = 's32[2]{0}', space=sflag, size = 0x8, scoped, tag = 'scoped memory for tpu_custom_call.1']
    %10 = vsyncpa [#allocation3], 0
    %s11 = scalar_lea.sflag [#allocation3], 1
    %12 = vsyncpa %s11, 0
    %13 = vsyncpa [#allocation6], 0
    %14 = vsyncpa [#allocation4], 0
    %s15 = scalar_lea.sflag [#allocation4], 1
    %16 = vsyncpa %s15, 0
    %17 = vsyncpa [#allocation10], 0
    %s18 = scalar_lea.sflag [#allocation10], 1
    %19 = vsyncpa %s18, 0
    loop: start=0, step=1, limit=4
    $region2: #{tpu_custom_call.1} parent=1 // loop_pre_header
      _
    $region3: #{tpu_custom_call.1} parent=1 // loop_header
      %s21 = sphi 0, %s25
      %p22 = scmp.ge.s32.totalorder %s21, 4
      %s31 = sphi 0, %s33
      %s34 = sphi 0, %s31
      %s35 = sphi 0, %s34
      %s51 = sphi 0, %s35
      %s55 = sphi 0, %s55
      %s57 = sphi 0, %s55
      %s58 = sphi 0, %s57
      %s72 = sphi 0, %s58
      %s76 = sphi 0, %s76
      %s78 = sphi 0, %s76
      %s79 = sphi 0, %s78
      %s93 = sphi 0, %s79
      %s99 = sphi 0, %s101
      %s102 = sphi 0, %s99
      %s103 = sphi 0, %s102
      %s119 = sphi 0, %s103
      %s125 = sphi 0, %s127
      %s128 = sphi 0, %s125
      %s129 = sphi 0, %s128
      %s145 = sphi 0, %s129
    $region4: #{tpu_custom_call.1} parent=1 // loop_header_branch
      %24 = sbr.rel (%p22) target = $region8
    $region5: #{tpu_custom_call.1} parent=1 // loop_body
      %s26 = ssub.s32 %s21, 1
      %s27 = ssub.s32 %s21, 2
      %s28 = sadd.s32 %s21, 1
      %s29 = ssub.s32 %s21, %s28
      %p30 = scmp.eq.s32.totalorder %s29, 0
      %s32 = sadd.s32 %s31, 1
      %s33 = scalar_select %p30, %s31, %s32
      %p36 = pneg %p30
      %p37 = scmp.eq.s32.totalorder %s21, 1
      %p38 = por %p36, %p37
      %p39 = scmp.ne.s32.totalorder %s31, %s34
      %p40 = scmp.eq.s32.totalorder %s21, 0
      %p41 = por %p39, %p40
      %p42 = scmp.ne.s32.totalorder %s31, %s34
      %p43 = scmp.eq.s32.totalorder %s26, 1
      %p44 = por %p42, %p43
      %p45 = scmp.ne.s32.totalorder %s34, %s35
      %p46 = scmp.eq.s32.totalorder %s26, 0
      %p47 = por %p45, %p46
      %p48 = scmp.ne.s32.totalorder %s34, %s35
      %p49 = scmp.eq.s32.totalorder %s27, 1
      %p50 = por %p48, %p49
      %p52 = scmp.ne.s32.totalorder %s35, %s51
      %p53 = scmp.eq.s32.totalorder %s27, 0
      %p54 = por %p52, %p53
      %s56 = sadd.s32 %s55, 1
      %p59 = scmp.eq.s32.totalorder %s21, 1
      %p60 = scmp.ne.s32.totalorder %s55, %s57
      %p61 = scmp.eq.s32.totalorder %s21, 0
      %p62 = por %p60, %p61
      %p63 = scmp.ne.s32.totalorder %s55, %s57
      %p64 = scmp.eq.s32.totalorder %s26, 1
      %p65 = por %p63, %p64
      %p66 = scmp.ne.s32.totalorder %s57, %s58
      %p67 = scmp.eq.s32.totalorder %s26, 0
      %p68 = por %p66, %p67
      %p69 = scmp.ne.s32.totalorder %s57, %s58
      %p70 = scmp.eq.s32.totalorder %s27, 1
      %p71 = por %p69, %p70
      %p73 = scmp.ne.s32.totalorder %s58, %s72
      %p74 = scmp.eq.s32.totalorder %s27, 0
      %p75 = por %p73, %p74
      %s77 = sadd.s32 %s76, 1
      %p80 = scmp.eq.s32.totalorder %s21, 1
      %p81 = scmp.ne.s32.totalorder %s76, %s78
      %p82 = scmp.eq.s32.totalorder %s21, 0
      %p83 = por %p81, %p82
      %p84 = scmp.ne.s32.totalorder %s76, %s78
      %p85 = scmp.eq.s32.totalorder %s26, 1
      %p86 = por %p84, %p85
      %p87 = scmp.ne.s32.totalorder %s78, %s79
      %p88 = scmp.eq.s32.totalorder %s26, 0
      %p89 = por %p87, %p88
      %p90 = scmp.ne.s32.totalorder %s78, %s79
      %p91 = scmp.eq.s32.totalorder %s27, 1
      %p92 = por %p90, %p91
      %p94 = scmp.ne.s32.totalorder %s79, %s93
      %p95 = scmp.eq.s32.totalorder %s27, 0
      %p96 = por %p94, %p95
      %s97 = ssub.s32 %s21, %s28
      %p98 = scmp.eq.s32.totalorder %s97, 0
      %s100 = sadd.s32 %s99, 1
      %s101 = scalar_select %p98, %s99, %s100
      %p104 = pneg %p98
      %p105 = scmp.eq.s32.totalorder %s21, 1
      %p106 = por %p104, %p105
      %p107 = scmp.ne.s32.totalorder %s99, %s102
      %p108 = scmp.eq.s32.totalorder %s21, 0
      %p109 = por %p107, %p108
      %p110 = scmp.ne.s32.totalorder %s99, %s102
      %p111 = scmp.eq.s32.totalorder %s26, 1
      %p112 = por %p110, %p111
      %p113 = scmp.ne.s32.totalorder %s102, %s103
      %p114 = scmp.eq.s32.totalorder %s26, 0
      %p115 = por %p113, %p114
      %p116 = scmp.ne.s32.totalorder %s102, %s103
      %p117 = scmp.eq.s32.totalorder %s27, 1
      %p118 = por %p116, %p117
      %p120 = scmp.ne.s32.totalorder %s103, %s119
      %p121 = scmp.eq.s32.totalorder %s27, 0
      %p122 = por %p120, %p121
      %s123 = ssub.s32 %s21, %s28
      %p124 = scmp.eq.s32.totalorder %s123, 0
      %s126 = sadd.s32 %s125, 1
      %s127 = scalar_select %p124, %s125, %s126
      %p130 = pneg %p124
      %p131 = scmp.eq.s32.totalorder %s21, 1
      %p132 = por %p130, %p131
      %p133 = scmp.ne.s32.totalorder %s125, %s128
      %p134 = scmp.eq.s32.totalorder %s21, 0
      %p135 = por %p133, %p134
      %p136 = scmp.ne.s32.totalorder %s125, %s128
      %p137 = scmp.eq.s32.totalorder %s26, 1
      %p138 = por %p136, %p137
      %p139 = scmp.ne.s32.totalorder %s128, %s129
      %p140 = scmp.eq.s32.totalorder %s26, 0
      %p141 = por %p139, %p140
      %p142 = scmp.ne.s32.totalorder %s128, %s129
      %p143 = scmp.eq.s32.totalorder %s27, 1
      %p144 = por %p142, %p143
      %p146 = scmp.ne.s32.totalorder %s129, %s145
      %p147 = scmp.eq.s32.totalorder %s27, 0
      %p148 = por %p146, %p147
      %p149 = scmp.le.s32.totalorder 1, %s21
      %p150 = scmp.lt.s32.totalorder %s21, 3
      %p151 = pnand %p149, %p150
      %p152 = pneg %p151
      // Predicated region
      $region9: #{tpu_custom_call.1} parent=5 // pred_check
        _
      $region10: #{tpu_custom_call.1} parent=5 // pred_check_branch
        %154 = sbr.rel (%p151) target = $region12
      $region11: #{tpu_custom_call.1} parent=5 // pred_region
        %s155 = ssub.s32 %s21, 1
        // Predicated region
        $region13: #{tpu_custom_call.1} parent=11 // pred_check
          %p156 = pneg %p68
        $region14: #{tpu_custom_call.1} parent=11 // pred_check_branch
          %158 = sbr.rel (%p156) target = $region16
        $region15: #{tpu_custom_call.1} parent=11 // pred_region
          %s160 = ssub.s32 1024, 1024
          %161 = vsyncadd [#allocation6], %s160
          %s162 = sshll.u32 [#allocation5], 4
          %s163 = int_to_ptr.vmem [resolvable:$true] %s162
          %168 = dma.hbm_to_vmem [thread:$0]  %s1, 1024, %s163, [#allocation6], 128, 128, 8
        $region16: #{tpu_custom_call.1} parent=11 // pred_fallthru
          _
        // Predicated region
        $region17: #{tpu_custom_call.1} parent=11 // pred_check
          %p169 = pneg %p89
        $region18: #{tpu_custom_call.1} parent=11 // pred_check_branch
          %171 = sbr.rel (%p169) target = $region20
        $region19: #{tpu_custom_call.1} parent=11 // pred_region
          %s173 = ssub.s32 512, 512
          %174 = vsyncadd [#allocation6], %s173
          %s175 = sshll.u32 [#allocation7], 4
          %s176 = int_to_ptr.vmem [resolvable:$true] %s175
          %181 = dma.hbm_to_vmem [thread:$0]  %s2, 512, %s176, [#allocation6], 128, 128, 8
        $region20: #{tpu_custom_call.1} parent=11 // pred_fallthru
          _
      $region12: #{tpu_custom_call.1} parent=5 // pred_fallthru
        _
      %p182 = scmp.lt.s32.totalorder %s21, 2
      // Predicated region
      $region21: #{tpu_custom_call.1} parent=5 // pred_check
        %p183 = pneg %p182
      $region22: #{tpu_custom_call.1} parent=5 // pred_check_branch
        %185 = sbr.rel (%p183) target = $region24
      $region23: #{tpu_custom_call.1} parent=5 // pred_region
        // Predicated region
        $region25: #{tpu_custom_call.1} parent=23 // pred_check
          %p186 = pneg %p41
        $region26: #{tpu_custom_call.1} parent=23 // pred_check_branch
          %188 = sbr.rel (%p186) target = $region28
        $region27: #{tpu_custom_call.1} parent=23 // pred_region
          %s189 = sand.u32 %s31, 1
          %s190 = scalar_lea.sflag [#allocation3], %s189
          %s191 = sand.u32 %s31, 1
          %s192 = smul.addr %s191, 128
          %s193 = scalar_lea.vmem [#allocation2], %s192
          %s194 = smul.u32 16, %s21
          %s196 = ssub.s32 2048, 2048
          %197 = vsyncadd %s190, %s196
          %s198 = smul.addr %s194, 128
          %s199 = scalar_lea.hbm %s0, %s198
          %s200 = sshll.u32 %s193, 4
          %s201 = int_to_ptr.vmem [resolvable:$true] %s200
          %206 = dma.hbm_to_vmem [thread:$0]  %s199, 2048, %s201, %s190, 128, 128, 8
        $region28: #{tpu_custom_call.1} parent=23 // pred_fallthru
          _
      $region24: #{tpu_custom_call.1} parent=5 // pred_fallthru
        _
      %p207 = scmp.le.s32.totalorder 1, %s21
      %p208 = scmp.lt.s32.totalorder %s21, 3
      %p209 = pnand %p207, %p208
      %p210 = pneg %p209
      // Predicated region
      $region29: #{tpu_custom_call.1} parent=5 // pred_check
        _
      $region30: #{tpu_custom_call.1} parent=5 // pred_check_branch
        %212 = sbr.rel (%p209) target = $region32
      $region31: #{tpu_custom_call.1} parent=5 // pred_region
        %s213 = ssub.s32 %s21, 1
        %s214 = sand.u32 %s34, 1
        %s215 = scalar_lea.sflag [#allocation3], %s214
        %s216 = sand.u32 %s34, 1
        %s217 = smul.addr %s216, 128
        %s218 = scalar_lea.vmem [#allocation2], %s217
        // Predicated region
        $region33: #{tpu_custom_call.1} parent=31 // pred_check
          %p219 = pneg %p47
        $region34: #{tpu_custom_call.1} parent=31 // pred_check_branch
          %221 = sbr.rel (%p219) target = $region36
        $region35: #{tpu_custom_call.1} parent=31 // pred_region
          %222 = dma.done %s215, 2048
        $region36: #{tpu_custom_call.1} parent=31 // pred_fallthru
          _
        // Predicated region
        $region37: #{tpu_custom_call.1} parent=31 // pred_check
          %p223 = pneg %p68
        $region38: #{tpu_custom_call.1} parent=31 // pred_check_branch
          %225 = sbr.rel (%p223) target = $region40
        $region39: #{tpu_custom_call.1} parent=31 // pred_region
          %226 = dma.done [#allocation6], 1024
        $region40: #{tpu_custom_call.1} parent=31 // pred_fallthru
          _
        // Predicated region
        $region41: #{tpu_custom_call.1} parent=31 // pred_check
          %p227 = pneg %p89
        $region42: #{tpu_custom_call.1} parent=31 // pred_check_branch
          %229 = sbr.rel (%p227) target = $region44
        $region43: #{tpu_custom_call.1} parent=31 // pred_region
          %230 = dma.done [#allocation6], 512
        $region44: #{tpu_custom_call.1} parent=31 // pred_fallthru
          _
        %s231 = sand.u32 %s34, 1
        %s232 = scalar_lea.sflag [#allocation3], %s231
        %s233 = sand.u32 %s34, 1
        %s234 = smul.addr %s233, 128
        %s235 = scalar_lea.vmem [#allocation2], %s234
        %p236 = pneg %p47
        %p237 = pneg %p44
        %p238 = pneg %p68
        %p239 = pneg %p65
        %p240 = pneg %p89
        %p241 = pneg %p86
        %p242 = pneg %p115
        %p243 = pneg %p112
        %s244 = sand.u32 %s102, 1
        %s245 = scalar_lea.sflag [#allocation4], %s244
        %s246 = sand.u32 %s102, 1
        %s247 = smul.addr %s246, 128
        %s248 = scalar_lea.vmem [#allocation8], %s247
        %p249 = pneg %p141
        %p250 = pneg %p138
        %s251 = sand.u32 %s128, 1
        %s252 = scalar_lea.sflag [#allocation10], %s251
        %s253 = sand.u32 %s128, 1
        %s254 = smul.addr %s253, 128
        %s255 = scalar_lea.vmem [#allocation9], %s254
        %s256 = smul.u32 16, %s26
        %s257 = smul.u32 16, %s26
        %s258 = smul.u32 16, %s26
        %v259 = vld [vmem:[%s218] sm:$0xff]
        %v260 = vld [vmem:[%s218 + $0x8] sm:$0xff]
        %v261 = vld [vmem:[%s218 + $0x10] sm:$0xff]
        %v262 = vld [vmem:[%s218 + $0x18] sm:$0xff]
        %v263 = vld [vmem:[%s218 + $0x20] sm:$0xff]
        %v264 = vld [vmem:[%s218 + $0x28] sm:$0xff]
        %v265 = vld [vmem:[%s218 + $0x30] sm:$0xff]
        %v266 = vld [vmem:[%s218 + $0x38] sm:$0xff]
        %v267 = vld [vmem:[%s218 + $0x40] sm:$0xff]
        %v268 = vld [vmem:[%s218 + $0x48] sm:$0xff]
        %v269 = vld [vmem:[%s218 + $0x50] sm:$0xff]
        %v270 = vld [vmem:[%s218 + $0x58] sm:$0xff]
        %v271 = vld [vmem:[%s218 + $0x60] sm:$0xff]
        %v272 = vld [vmem:[%s218 + $0x68] sm:$0xff]
        %v273 = vld [vmem:[%s218 + $0x70] sm:$0xff]
        %v274 = vld [vmem:[%s218 + $0x78] sm:$0xff]
        %v275 = vld [vmem:[#allocation5] sm:$0xff]
        %v276 = vld [vmem:[#allocation5 + $0x8] sm:$0xff]
        %v277 = vld [vmem:[#allocation5 + $0x10] sm:$0xff]
        %v278 = vld [vmem:[#allocation5 + $0x18] sm:$0xff]
        %v279 = vld [vmem:[#allocation5 + $0x20] sm:$0xff]
        %v280 = vld [vmem:[#allocation5 + $0x28] sm:$0xff]
        %v281 = vld [vmem:[#allocation5 + $0x30] sm:$0xff]
        %v282 = vld [vmem:[#allocation5 + $0x38] sm:$0xff]
        %vm283 = vcmask 523264
        %v285 = vsel %vm283, %v259, 0
        %v288 = vsel %vm283, %v260, 0
        %v291 = vsel %vm283, %v261, 0
        %v294 = vsel %vm283, %v262, 0
        %v297 = vsel %vm283, %v263, 0
        %v300 = vsel %vm283, %v264, 0
        %v303 = vsel %vm283, %v265, 0
        %v306 = vsel %vm283, %v266, 0
        %v309 = vsel %vm283, %v267, 0
        %v312 = vsel %vm283, %v268, 0
        %v315 = vsel %vm283, %v269, 0
        %v318 = vsel %vm283, %v270, 0
        %v321 = vsel %vm283, %v271, 0
        %v324 = vsel %vm283, %v272, 0
        %v327 = vsel %vm283, %v273, 0
        %v330 = vsel %vm283, %v274, 0
        %332 = vmatprep.subr.mxu0 0.0
        %333 = vmatpush1.msra.mxu0 %v275
        %334 = vmatprep.subr.mxu0 0.0
        %335 = vmatpush1.msra.mxu0 %v276
        %336 = vmatprep.subr.mxu0 0.0
        %337 = vmatpush1.msra.mxu0 %v277
        %338 = vmatprep.subr.mxu0 0.0
        %339 = vmatpush1.msra.mxu0 %v278
        %340 = vmatprep.subr.mxu0 0.0
        %341 = vmatpush1.msra.mxu0 %v279
        %342 = vmatprep.subr.mxu0 0.0
        %343 = vmatpush1.msra.mxu0 %v280
        %344 = vmatprep.subr.mxu0 0.0
        %345 = vmatpush1.msra.mxu0 %v281
        %346 = vmatprep.subr.mxu0 0.0
        %347 = vmatpush1.msra.mxu0 %v282
        %348 = vmatprep.subr.mxu0 0.0
        %349 = vmatpush1.msra.mxu0 0.0
        %350 = vmatprep.subr.mxu0 0.0
        %351 = vmatpush1.msra.mxu0 0.0
        %352 = vmatprep.subr.mxu0 0.0
        %353 = vmatpush1.msra.mxu0 0.0
        %354 = vmatprep.subr.mxu0 0.0
        %355 = vmatpush1.msra.mxu0 0.0
        %356 = vmatprep.subr.mxu0 0.0
        %357 = vmatpush1.msra.mxu0 0.0
        %358 = vmatprep.subr.mxu0 0.0
        %359 = vmatpush1.msra.mxu0 0.0
        %360 = vmatprep.subr.mxu0 0.0
        %361 = vmatpush1.msra.mxu0 0.0
        %362 = vmatprep.subr.mxu0 0.0
        %363 = vmatpush1.msra.mxu0 0.0
        %364 = vmatprep.subr.mxu0 0.0
        %365 = vmatpush1.msra.mxu0 0.0
        %366 = vmatprep.subr.mxu0 0.0
        %367 = vmatpush1.msra.mxu0 0.0
        %368 = vmatprep.subr.mxu0 0.0
        %369 = vmatpush1.msra.mxu0 0.0
        %370 = vmatprep.subr.mxu0 0.0
        %371 = vmatpush1.msra.mxu0 0.0
        %372 = vmatprep.subr.mxu0 0.0
        %373 = vmatpush1.msra.mxu0 0.0
        %374 = vmatprep.subr.mxu0 0.0
        %375 = vmatpush1.msra.mxu0 0.0
        %376 = vmatprep.subr.mxu0 0.0
        %377 = vmatpush1.msra.mxu0 0.0
        %378 = vmatprep.subr.mxu0 0.0
        %379 = vmatpush1.msra.mxu0 0.0
        %380 = vmatprep.subr.mxu0 0.0
        %381 = vmatpush1.msra.mxu0 0.0
        %382 = vmatprep.subr.mxu0 0.0
        %383 = vmatpush1.msra.mxu0 0.0
        %384 = vmatprep.subr.mxu0 0.0
        %385 = vmatpush1.msra.mxu0 0.0
        %386 = vmatprep.subr.mxu0 0.0
        %387 = vmatpush1.msra.mxu0 0.0
        %388 = vmatprep.subr.mxu0 0.0
        %389 = vmatpush1.msra.mxu0 0.0
        %390 = vmatprep.subr.mxu0 0.0
        %391 = vmatpush1.msra.mxu0 0.0
        %392 = vmatprep.subr.mxu0 0.0
        %393 = vmatpush1.msra.mxu0 0.0
        %394 = vmatprep.subr.mxu0 0.0
        %395 = vmatpush1.msra.mxu0 0.0
        %396 = vmatprep.mubr.f32.mxu0 0.0
        %397 = vmatmul.mubr.f32.gmra.mrb[0].mxu0 %v285
        %v398 = vpop.f32.mrb[0].mxu0
        %v399 = vadd.f32 0.0, %v398
        %v400 = vpop.f32.mrb[0].mxu0
        %401 = vmatprep.mubr.f32.mxu0 0.0
        %402 = vmatmul.mubr.f32.gmra.mrb[0].mxu0 %v288
        %v403 = vpop.f32.mrb[0].mxu0
        %v404 = vadd.f32 0.0, %v403
        %v405 = vpop.f32.mrb[0].mxu0
        %406 = vmatprep.mubr.f32.mxu0 0.0
        %407 = vmatmul.mubr.f32.gmra.mrb[0].mxu0 %v291
        %v408 = vpop.f32.mrb[0].mxu0
        %v409 = vadd.f32 0.0, %v408
        %v410 = vpop.f32.mrb[0].mxu0
        %411 = vmatprep.mubr.f32.mxu0 0.0
        %412 = vmatmul.mubr.f32.gmra.mrb[0].mxu0 %v294
        %v413 = vpop.f32.mrb[0].mxu0
        %v414 = vadd.f32 0.0, %v413
        %v415 = vpop.f32.mrb[0].mxu0
        %416 = vmatprep.mubr.f32.mxu0 0.0
        %417 = vmatmul.mubr.f32.gmra.mrb[0].mxu0 %v297
        %v418 = vpop.f32.mrb[0].mxu0
        %v419 = vadd.f32 0.0, %v418
        %v420 = vpop.f32.mrb[0].mxu0
        %421 = vmatprep.mubr.f32.mxu0 0.0
        %422 = vmatmul.mubr.f32.gmra.mrb[0].mxu0 %v300
        %v423 = vpop.f32.mrb[0].mxu0
        %v424 = vadd.f32 0.0, %v423
        %v425 = vpop.f32.mrb[0].mxu0
        %426 = vmatprep.mubr.f32.mxu0 0.0
        %427 = vmatmul.mubr.f32.gmra.mrb[0].mxu0 %v303
        %v428 = vpop.f32.mrb[0].mxu0
        %v429 = vadd.f32 0.0, %v428
        %v430 = vpop.f32.mrb[0].mxu0
        %431 = vmatprep.mubr.f32.mxu0 0.0
        %432 = vmatmul.mubr.f32.gmra.mrb[0].mxu0 %v306
        %v433 = vpop.f32.mrb[0].mxu0
        %v434 = vadd.f32 0.0, %v433
        %v435 = vpop.f32.mrb[0].mxu0
        %436 = vmatprep.mubr.f32.mxu0 0.0
        %437 = vmatmul.mubr.f32.gmra.mrb[0].mxu0 %v309
        %v438 = vpop.f32.mrb[0].mxu0
        %v439 = vadd.f32 0.0, %v438
        %v440 = vpop.f32.mrb[0].mxu0
        %441 = vmatprep.mubr.f32.mxu0 0.0
        %442 = vmatmul.mubr.f32.gmra.mrb[0].mxu0 %v312
        %v443 = vpop.f32.mrb[0].mxu0
        %v444 = vadd.f32 0.0, %v443
        %v445 = vpop.f32.mrb[0].mxu0
        %446 = vmatprep.mubr.f32.mxu0 0.0
        %447 = vmatmul.mubr.f32.gmra.mrb[0].mxu0 %v315
        %v448 = vpop.f32.mrb[0].mxu0
        %v449 = vadd.f32 0.0, %v448
        %v450 = vpop.f32.mrb[0].mxu0
        %451 = vmatprep.mubr.f32.mxu0 0.0
        %452 = vmatmul.mubr.f32.gmra.mrb[0].mxu0 %v318
        %v453 = vpop.f32.mrb[0].mxu0
        %v454 = vadd.f32 0.0, %v453
        %v455 = vpop.f32.mrb[0].mxu0
        %456 = vmatprep.mubr.f32.mxu0 0.0
        %457 = vmatmul.mubr.f32.gmra.mrb[0].mxu0 %v321
        %v458 = vpop.f32.mrb[0].mxu0
        %v459 = vadd.f32 0.0, %v458
        %v460 = vpop.f32.mrb[0].mxu0
        %461 = vmatprep.mubr.f32.mxu0 0.0
        %462 = vmatmul.mubr.f32.gmra.mrb[0].mxu0 %v324
        %v463 = vpop.f32.mrb[0].mxu0
        %v464 = vadd.f32 0.0, %v463
        %v465 = vpop.f32.mrb[0].mxu0
        %466 = vmatprep.mubr.f32.mxu0 0.0
        %467 = vmatmul.mubr.f32.gmra.mrb[0].mxu0 %v327
        %v468 = vpop.f32.mrb[0].mxu0
        %v469 = vadd.f32 0.0, %v468
        %v470 = vpop.f32.mrb[0].mxu0
        %471 = vmatprep.mubr.f32.mxu0 0.0
        %472 = vmatmul.mubr.f32.gmra.mrb[0].mxu0 %v330
        %v473 = vpop.f32.mrb[0].mxu0
        %v474 = vadd.f32 0.0, %v473
        %v475 = vpop.f32.mrb[0].mxu0
        %476 = vdwg.mxu0
        %vm477 = vcmask 261120
        %478 = vst.msk [vmem:[%s248] sm:$0xff] %vm477, %v399
        %479 = vst.msk [vmem:[%s248 + $0x8] sm:$0xff] %vm477, %v404
        %480 = vst.msk [vmem:[%s248 + $0x10] sm:$0xff] %vm477, %v409
        %481 = vst.msk [vmem:[%s248 + $0x18] sm:$0xff] %vm477, %v414
        %482 = vst.msk [vmem:[%s248 + $0x20] sm:$0xff] %vm477, %v419
        %483 = vst.msk [vmem:[%s248 + $0x28] sm:$0xff] %vm477, %v424
        %484 = vst.msk [vmem:[%s248 + $0x30] sm:$0xff] %vm477, %v429
        %485 = vst.msk [vmem:[%s248 + $0x38] sm:$0xff] %vm477, %v434
        %486 = vst.msk [vmem:[%s248 + $0x40] sm:$0xff] %vm477, %v439
        %487 = vst.msk [vmem:[%s248 + $0x48] sm:$0xff] %vm477, %v444
        %488 = vst.msk [vmem:[%s248 + $0x50] sm:$0xff] %vm477, %v449
        %489 = vst.msk [vmem:[%s248 + $0x58] sm:$0xff] %vm477, %v454
        %490 = vst.msk [vmem:[%s248 + $0x60] sm:$0xff] %vm477, %v459
        %491 = vst.msk [vmem:[%s248 + $0x68] sm:$0xff] %vm477, %v464
        %492 = vst.msk [vmem:[%s248 + $0x70] sm:$0xff] %vm477, %v469
        %493 = vst.msk [vmem:[%s248 + $0x78] sm:$0xff] %vm477, %v474
        %v494 = vld [vmem:[#allocation7] sm:$0xff]
        %v495 = vld [vmem:[#allocation7 + $0x8] sm:$0xff]
        %v496 = vld [vmem:[#allocation7 + $0x10] sm:$0xff]
        %v497 = vld [vmem:[#allocation7 + $0x18] sm:$0xff]
        %v499 = vsel %vm477, %v399, 0
        %v502 = vsel %vm477, %v404, 0
        %v505 = vsel %vm477, %v409, 0
        %v508 = vsel %vm477, %v414, 0
        %v511 = vsel %vm477, %v419, 0
        %v514 = vsel %vm477, %v424, 0
        %v517 = vsel %vm477, %v429, 0
        %v520 = vsel %vm477, %v434, 0
        %v523 = vsel %vm477, %v439, 0
        %v526 = vsel %vm477, %v444, 0
        %v529 = vsel %vm477, %v449, 0
        %v532 = vsel %vm477, %v454, 0
        %v535 = vsel %vm477, %v459, 0
        %v538 = vsel %vm477, %v464, 0
        %v541 = vsel %vm477, %v469, 0
        %v544 = vsel %vm477, %v474, 0
        %546 = vmatprep.subr.mxu0 0.0
        %547 = vmatpush1.msra.mxu0 %v494
        %548 = vmatprep.subr.mxu0 0.0
        %549 = vmatpush1.msra.mxu0 %v495
        %550 = vmatprep.subr.mxu0 0.0
        %551 = vmatpush1.msra.mxu0 %v496
        %552 = vmatprep.subr.mxu0 0.0
        %553 = vmatpush1.msra.mxu0 %v497
        %554 = vmatprep.subr.mxu0 0.0
        %555 = vmatpush1.msra.mxu0 0.0
        %556 = vmatprep.subr.mxu0 0.0
        %557 = vmatpush1.msra.mxu0 0.0
        %558 = vmatprep.subr.mxu0 0.0
        %559 = vmatpush1.msra.mxu0 0.0
        %560 = vmatprep.subr.mxu0 0.0
        %561 = vmatpush1.msra.mxu0 0.0
        %562 = vmatprep.subr.mxu0 0.0
        %563 = vmatpush1.msra.mxu0 0.0
        %564 = vmatprep.subr.mxu0 0.0
        %565 = vmatpush1.msra.mxu0 0.0
        %566 = vmatprep.subr.mxu0 0.0
        %567 = vmatpush1.msra.mxu0 0.0
        %568 = vmatprep.subr.mxu0 0.0
        %569 = vmatpush1.msra.mxu0 0.0
        %570 = vmatprep.subr.mxu0 0.0
        %571 = vmatpush1.msra.mxu0 0.0
        %572 = vmatprep.subr.mxu0 0.0
        %573 = vmatpush1.msra.mxu0 0.0
        %574 = vmatprep.subr.mxu0 0.0
        %575 = vmatpush1.msra.mxu0 0.0
        %576 = vmatprep.subr.mxu0 0.0
        %577 = vmatpush1.msra.mxu0 0.0
        %578 = vmatprep.subr.mxu0 0.0
        %579 = vmatpush1.msra.mxu0 0.0
        %580 = vmatprep.subr.mxu0 0.0
        %581 = vmatpush1.msra.mxu0 0.0
        %582 = vmatprep.subr.mxu0 0.0
        %583 = vmatpush1.msra.mxu0 0.0
        %584 = vmatprep.subr.mxu0 0.0
        %585 = vmatpush1.msra.mxu0 0.0
        %586 = vmatprep.subr.mxu0 0.0
        %587 = vmatpush1.msra.mxu0 0.0
        %588 = vmatprep.subr.mxu0 0.0
        %589 = vmatpush1.msra.mxu0 0.0
        %590 = vmatprep.subr.mxu0 0.0
        %591 = vmatpush1.msra.mxu0 0.0
        %592 = vmatprep.subr.mxu0 0.0
        %593 = vmatpush1.msra.mxu0 0.0
        %594 = vmatprep.subr.mxu0 0.0
        %595 = vmatpush1.msra.mxu0 0.0
        %596 = vmatprep.subr.mxu0 0.0
        %597 = vmatpush1.msra.mxu0 0.0
        %598 = vmatprep.subr.mxu0 0.0
        %599 = vmatpush1.msra.mxu0 0.0
        %600 = vmatprep.subr.mxu0 0.0
        %601 = vmatpush1.msra.mxu0 0.0
        %602 = vmatprep.subr.mxu0 0.0
        %603 = vmatpush1.msra.mxu0 0.0
        %604 = vmatprep.subr.mxu0 0.0
        %605 = vmatpush1.msra.mxu0 0.0
        %606 = vmatprep.subr.mxu0 0.0
        %607 = vmatpush1.msra.mxu0 0.0
        %608 = vmatprep.subr.mxu0 0.0
        %609 = vmatpush1.msra.mxu0 0.0
        %610 = vmatprep.mubr.f32.mxu0 0.0
        %611 = vmatmul.mubr.f32.gmra.mrb[0].mxu0 %v499
        %v612 = vpop.f32.mrb[0].mxu0
        %v613 = vadd.f32 0.0, %v612
        %v614 = vpop.f32.mrb[0].mxu0
        %615 = vmatprep.mubr.f32.mxu0 0.0
        %616 = vmatmul.mubr.f32.gmra.mrb[0].mxu0 %v502
        %v617 = vpop.f32.mrb[0].mxu0
        %v618 = vadd.f32 0.0, %v617
        %v619 = vpop.f32.mrb[0].mxu0
        %620 = vmatprep.mubr.f32.mxu0 0.0
        %621 = vmatmul.mubr.f32.gmra.mrb[0].mxu0 %v505
        %v622 = vpop.f32.mrb[0].mxu0
        %v623 = vadd.f32 0.0, %v622
        %v624 = vpop.f32.mrb[0].mxu0
        %625 = vmatprep.mubr.f32.mxu0 0.0
        %626 = vmatmul.mubr.f32.gmra.mrb[0].mxu0 %v508
        %v627 = vpop.f32.mrb[0].mxu0
        %v628 = vadd.f32 0.0, %v627
        %v629 = vpop.f32.mrb[0].mxu0
        %630 = vmatprep.mubr.f32.mxu0 0.0
        %631 = vmatmul.mubr.f32.gmra.mrb[0].mxu0 %v511
        %v632 = vpop.f32.mrb[0].mxu0
        %v633 = vadd.f32 0.0, %v632
        %v634 = vpop.f32.mrb[0].mxu0
        %635 = vmatprep.mubr.f32.mxu0 0.0
        %636 = vmatmul.mubr.f32.gmra.mrb[0].mxu0 %v514
        %v637 = vpop.f32.mrb[0].mxu0
        %v638 = vadd.f32 0.0, %v637
        %v639 = vpop.f32.mrb[0].mxu0
        %640 = vmatprep.mubr.f32.mxu0 0.0
        %641 = vmatmul.mubr.f32.gmra.mrb[0].mxu0 %v517
        %v642 = vpop.f32.mrb[0].mxu0
        %v643 = vadd.f32 0.0, %v642
        %v644 = vpop.f32.mrb[0].mxu0
        %645 = vmatprep.mubr.f32.mxu0 0.0
        %646 = vmatmul.mubr.f32.gmra.mrb[0].mxu0 %v520
        %v647 = vpop.f32.mrb[0].mxu0
        %v648 = vadd.f32 0.0, %v647
        %v649 = vpop.f32.mrb[0].mxu0
        %650 = vmatprep.mubr.f32.mxu0 0.0
        %651 = vmatmul.mubr.f32.gmra.mrb[0].mxu0 %v523
        %v652 = vpop.f32.mrb[0].mxu0
        %v653 = vadd.f32 0.0, %v652
        %v654 = vpop.f32.mrb[0].mxu0
        %655 = vmatprep.mubr.f32.mxu0 0.0
        %656 = vmatmul.mubr.f32.gmra.mrb[0].mxu0 %v526
        %v657 = vpop.f32.mrb[0].mxu0
        %v658 = vadd.f32 0.0, %v657
        %v659 = vpop.f32.mrb[0].mxu0
        %660 = vmatprep.mubr.f32.mxu0 0.0
        %661 = vmatmul.mubr.f32.gmra.mrb[0].mxu0 %v529
        %v662 = vpop.f32.mrb[0].mxu0
        %v663 = vadd.f32 0.0, %v662
        %v664 = vpop.f32.mrb[0].mxu0
        %665 = vmatprep.mubr.f32.mxu0 0.0
        %666 = vmatmul.mubr.f32.gmra.mrb[0].mxu0 %v532
        %v667 = vpop.f32.mrb[0].mxu0
        %v668 = vadd.f32 0.0, %v667
        %v669 = vpop.f32.mrb[0].mxu0
        %670 = vmatprep.mubr.f32.mxu0 0.0
        %671 = vmatmul.mubr.f32.gmra.mrb[0].mxu0 %v535
        %v672 = vpop.f32.mrb[0].mxu0
        %v673 = vadd.f32 0.0, %v672
        %v674 = vpop.f32.mrb[0].mxu0
        %675 = vmatprep.mubr.f32.mxu0 0.0
        %676 = vmatmul.mubr.f32.gmra.mrb[0].mxu0 %v538
        %v677 = vpop.f32.mrb[0].mxu0
        %v678 = vadd.f32 0.0, %v677
        %v679 = vpop.f32.mrb[0].mxu0
        %680 = vmatprep.mubr.f32.mxu0 0.0
        %681 = vmatmul.mubr.f32.gmra.mrb[0].mxu0 %v541
        %v682 = vpop.f32.mrb[0].mxu0
        %v683 = vadd.f32 0.0, %v682
        %v684 = vpop.f32.mrb[0].mxu0
        %685 = vmatprep.mubr.f32.mxu0 0.0
        %686 = vmatmul.mubr.f32.gmra.mrb[0].mxu0 %v544
        %v687 = vpop.f32.mrb[0].mxu0
        %v688 = vadd.f32 0.0, %v687
        %v689 = vpop.f32.mrb[0].mxu0
        %690 = vdwg.mxu0
        %vm691 = vcmask 64512
        %692 = vst.msk [vmem:[%s255] sm:$0xff] %vm691, %v613
        %693 = vst.msk [vmem:[%s255 + $0x8] sm:$0xff] %vm691, %v618
        %694 = vst.msk [vmem:[%s255 + $0x10] sm:$0xff] %vm691, %v623
        %695 = vst.msk [vmem:[%s255 + $0x18] sm:$0xff] %vm691, %v628
        %696 = vst.msk [vmem:[%s255 + $0x20] sm:$0xff] %vm691, %v633
        %697 = vst.msk [vmem:[%s255 + $0x28] sm:$0xff] %vm691, %v638
        %698 = vst.msk [vmem:[%s255 + $0x30] sm:$0xff] %vm691, %v643
        %699 = vst.msk [vmem:[%s255 + $0x38] sm:$0xff] %vm691, %v648
        %700 = vst.msk [vmem:[%s255 + $0x40] sm:$0xff] %vm691, %v653
        %701 = vst.msk [vmem:[%s255 + $0x48] sm:$0xff] %vm691, %v658
        %702 = vst.msk [vmem:[%s255 + $0x50] sm:$0xff] %vm691, %v663
        %703 = vst.msk [vmem:[%s255 + $0x58] sm:$0xff] %vm691, %v668
        %704 = vst.msk [vmem:[%s255 + $0x60] sm:$0xff] %vm691, %v673
        %705 = vst.msk [vmem:[%s255 + $0x68] sm:$0xff] %vm691, %v678
        %706 = vst.msk [vmem:[%s255 + $0x70] sm:$0xff] %vm691, %v683
        %707 = vst.msk [vmem:[%s255 + $0x78] sm:$0xff] %vm691, %v688
        %s708 = sand.u32 %s102, 1
        %s709 = scalar_lea.sflag [#allocation4], %s708
        %s710 = sand.u32 %s102, 1
        %s711 = smul.addr %s710, 128
        %s712 = scalar_lea.vmem [#allocation8], %s711
        %s713 = sand.u32 %s128, 1
        %s714 = scalar_lea.sflag [#allocation10], %s713
        %s715 = sand.u32 %s128, 1
        %s716 = smul.addr %s715, 128
        %s717 = scalar_lea.vmem [#allocation9], %s716
        // Predicated region
        $region45: #{tpu_custom_call.1} parent=31 // pred_check
          %p718 = pneg %p112
        $region46: #{tpu_custom_call.1} parent=31 // pred_check_branch
          %720 = sbr.rel (%p718) target = $region48
        $region47: #{tpu_custom_call.1} parent=31 // pred_region
          %s721 = smul.u32 16, %s26
          %s723 = ssub.s32 2048, 2048
          %724 = vsyncadd %s709, %s723
          %s725 = smul.addr %s721, 128
          %s726 = scalar_lea.hbm %s3, %s725
          %s727 = sshll.u32 %s712, 4
          %s728 = int_to_ptr.vmem [resolvable:$true] %s727
          %733 = dma.vmem_to_hbm [thread:$0]  %s728, 2048, %s726, %s709, 128, 128, 8
        $region48: #{tpu_custom_call.1} parent=31 // pred_fallthru
          _
        // Predicated region
        $region49: #{tpu_custom_call.1} parent=31 // pred_check
          %p734 = pneg %p138
        $region50: #{tpu_custom_call.1} parent=31 // pred_check_branch
          %736 = sbr.rel (%p734) target = $region52
        $region51: #{tpu_custom_call.1} parent=31 // pred_region
          %s737 = smul.u32 16, %s26
          %s739 = ssub.s32 2048, 2048
          %740 = vsyncadd %s714, %s739
          %s741 = smul.addr %s737, 128
          %s742 = scalar_lea.hbm %s4, %s741
          %s743 = sshll.u32 %s717, 4
          %s744 = int_to_ptr.vmem [resolvable:$true] %s743
          %749 = dma.vmem_to_hbm [thread:$0]  %s744, 2048, %s742, %s714, 128, 128, 8
        $region52: #{tpu_custom_call.1} parent=31 // pred_fallthru
          _
      $region32: #{tpu_custom_call.1} parent=5 // pred_fallthru
        _
      %p750 = scmp.le.s32.totalorder 2, %s21
      // Predicated region
      $region53: #{tpu_custom_call.1} parent=5 // pred_check
        %p751 = pneg %p750
      $region54: #{tpu_custom_call.1} parent=5 // pred_check_branch
        %753 = sbr.rel (%p751) target = $region56
      $region55: #{tpu_custom_call.1} parent=5 // pred_region
        %s754 = ssub.s32 %s21, 2
        // Predicated region
        $region57: #{tpu_custom_call.1} parent=55 // pred_check
          %p755 = pneg %p118
        $region58: #{tpu_custom_call.1} parent=55 // pred_check_branch
          %757 = sbr.rel (%p755) target = $region60
        $region59: #{tpu_custom_call.1} parent=55 // pred_region
          %s758 = sand.u32 %s103, 1
          %s759 = scalar_lea.sflag [#allocation4], %s758
          %s760 = sand.u32 %s103, 1
          %s761 = smul.addr %s760, 128
          %s762 = scalar_lea.vmem [#allocation8], %s761
          %763 = dma.done %s759, 2048
        $region60: #{tpu_custom_call.1} parent=55 // pred_fallthru
          _
        // Predicated region
        $region61: #{tpu_custom_call.1} parent=55 // pred_check
          %p764 = pneg %p144
        $region62: #{tpu_custom_call.1} parent=55 // pred_check_branch
          %766 = sbr.rel (%p764) target = $region64
        $region63: #{tpu_custom_call.1} parent=55 // pred_region
          %s767 = sand.u32 %s129, 1
          %s768 = scalar_lea.sflag [#allocation10], %s767
          %s769 = sand.u32 %s129, 1
          %s770 = smul.addr %s769, 128
          %s771 = scalar_lea.vmem [#allocation9], %s770
          %772 = dma.done %s768, 2048
        $region64: #{tpu_custom_call.1} parent=55 // pred_fallthru
          _
      $region56: #{tpu_custom_call.1} parent=5 // pred_fallthru
        _
    $region6: #{tpu_custom_call.1} parent=1 // loop_footer
      %s25 = sadd.s32 1, %s21
    $region7: #{tpu_custom_call.1} parent=1 // loop_footer_branch
      %20 = sbr.rel target = $region3
    $region8: #{tpu_custom_call.1} parent=1 // loop_exit
      _
    %773 = vsyncpa [#allocation3], 1
    %s774 = scalar_lea.sflag [#allocation3], 1
    %775 = vsyncpa %s774, 1
    %776 = vsyncpa [#allocation6], 1
    %777 = vsyncpa [#allocation4], 1
    %s778 = scalar_lea.sflag [#allocation4], 1
    %779 = vsyncpa %s778, 1
    %780 = vsyncpa [#allocation10], 1
    %s781 = scalar_lea.sflag [#allocation10], 1
    %782 = vsyncpa %s781, 1

</llo_original>
